<compile_context>
chip_gen: v5e
topology: v5e:2x2
jax: 0.10.0
libtpu: 0.0.40
codegen_flags: <defaults>
</compile_context>

<pallas_src>
import functools

import jax
import jax.numpy as jnp
from jax import lax
from jax.experimental import pallas as pl
from jax.experimental.pallas import tpu as pltpu


# ---------------------------------------------------------------------------
# One-time parameter preparation (hoisted out of the per-step path).
# ---------------------------------------------------------------------------
def prepare_rnn_params(w_ih, b_ih, w_io, b_io, input_size):
    """Fuse i2h/i2o into one [in, H+O] weight pair + one bias row.

    w_ih: [H, I+H]  (PyTorch nn.Linear layout)
    w_io: [O, I+H]
    Returns (w_x [I, H+O], w_h [H, H+O], bias [1, H+O]).
    """
    w_cat = jnp.concatenate([w_ih, w_io], axis=0).T        # [I+H, H+O]
    w_x = w_cat[:input_size]                               # [I, H+O]
    w_h = w_cat[input_size:]                               # [H, H+O]
    bias = jnp.concatenate([b_ih, b_io]).reshape(1, -1)    # [1, H+O]
    return w_x, w_h, bias


# ---------------------------------------------------------------------------
# Single-cell kernel (matches RNN.forward exactly).
# ---------------------------------------------------------------------------
def _rnn_cell_kernel(x_ref, h_ref, wx_ref, wh_ref, b_ref,
                     out_ref, h_new_ref, *, hidden_size):
    # cat(x, h) @ W folded into x @ W_x + h @ W_h; i2h and i2o fused into one
    # (B, H+O) matmul result, split with static lane slices.
    z = (jnp.dot(x_ref[...], wx_ref[...], preferred_element_type=jnp.float32)
         + jnp.dot(h_ref[...], wh_ref[...], preferred_element_type=jnp.float32)
         + b_ref[...])

    h_new = z[:, :hidden_size]
    logits = z[:, hidden_size:]

    # log_softmax(logits, axis=1), numerically stable, in f32.
    m = jnp.max(logits, axis=-1, keepdims=True)
    zz = logits - m
    lse = jnp.log(jnp.sum(jnp.exp(zz), axis=-1, keepdims=True))

    out_ref[...] = (zz - lse).astype(out_ref.dtype)
    h_new_ref[...] = h_new.astype(h_new_ref.dtype)


def rnn_cell(x, hidden, w_x, w_h, bias):
    """One RNN-cell step with pre-fused parameters -> (log_probs, hidden)."""
    B, I = x.shape
    H = hidden.shape[1]
    HO = w_x.shape[1]
    O = HO - H

    def full(shape):
        # Full-array block (block_shape == array shape satisfies TPU tiling rules).
        return pl.BlockSpec(shape, lambda i, _s=shape: tuple(0 for _ in _s))

    out, h_new = pl.pallas_call(
        functools.partial(_rnn_cell_kernel, hidden_size=H),
        out_shape=(jax.ShapeDtypeStruct((B, O), x.dtype),
                   jax.ShapeDtypeStruct((B, H), x.dtype)),
        grid=(1,),
        in_specs=[full((B, I)), full((B, H)),
                  full((I, HO)), full((H, HO)), full((1, HO))],
        out_specs=(full((B, O)), full((B, H))),
        compiler_params=pltpu.CompilerParams(
            dimension_semantics=("arbitrary",)),
    )(x, hidden, w_x, w_h, bias)
    return out, h_new


def rnn_forward(x, hidden, w_ih, b_ih, w_io, b_io):
    """Convenience wrapper matching RNN.forward(input, hidden) signature."""
    w_x, w_h, bias = prepare_rnn_params(w_ih, b_ih, w_io, b_io, x.shape[1])
    return rnn_cell(x, hidden, w_x, w_h, bias)


# ---------------------------------------------------------------------------
# Multi-timestep sequence kernel (implements the old TODO):
#   grid=(T//CT,) "arbitrary", weights resident, hidden state in VMEM scratch,
#   chunked output writeback.
# ---------------------------------------------------------------------------
def _rnn_seq_kernel(x_ref, h0_ref, wx_ref, wh_ref, b_ref,
                    out_ref, h_final_ref, h_scratch,
                    *, hidden_size, chunk_steps):
    @pl.when(pl.program_id(0) == 0)
    def _init():
        h_scratch[...] = h0_ref[...].astype(jnp.float32)

    # Weights stay resident across the whole grid; load once per chunk.
    wx = wx_ref[...]
    wh = wh_ref[...]
    b = b_ref[...]

    def step(t, carry):
        h = h_scratch[...]
        z = (jnp.dot(x_ref[t], wx, preferred_element_type=jnp.float32)
             + jnp.dot(h, wh, preferred_element_type=jnp.float32)
             + b)
        h_new = z[:, :hidden_size]
        logits = z[:, hidden_size:]
        m = jnp.max(logits, axis=-1, keepdims=True)
        zz = logits - m
        lse = jnp.log(jnp.sum(jnp.exp(zz), axis=-1, keepdims=True))
        out_ref[t] = (zz - lse).astype(out_ref.dtype)   # VMEM store; HBM DMA per chunk
        h_scratch[...] = h_new
        return carry

    lax.fori_loop(0, chunk_steps, step, 0, unroll=True)

    @pl.when(pl.program_id(0) == pl.num_programs(0) - 1)
    def _finalize():
        h_final_ref[...] = h_scratch[...].astype(h_final_ref.dtype)


def rnn_sequence(xs, h0, w_x, w_h, bias, *, chunk_steps=4):
    """Run the cell over xs[t] for t in [0, T). Returns (log_probs[T,B,O], h_T)."""
    T, B, I = xs.shape
    H = h0.shape[1]
    HO = w_x.shape[1]
    O = HO - H
    assert T % chunk_steps == 0, "T must be a multiple of chunk_steps"
    num_chunks = T // chunk_steps

    out, h_final = pl.pallas_call(
        functools.partial(_rnn_seq_kernel, hidden_size=H,
                          chunk_steps=chunk_steps),
        out_shape=(jax.ShapeDtypeStruct((T, B, O), xs.dtype),
                   jax.ShapeDtypeStruct((B, H), xs.dtype)),
        grid=(num_chunks,),
        in_specs=[
            pl.BlockSpec((chunk_steps, B, I), lambda c: (c, 0, 0)),  # streamed x
            pl.BlockSpec((B, H), lambda c: (0, 0)),                  # h0 (resident)
            pl.BlockSpec((I, HO), lambda c: (0, 0)),                 # weights resident
            pl.BlockSpec((H, HO), lambda c: (0, 0)),
            pl.BlockSpec((1, HO), lambda c: (0, 0)),
        ],
        out_specs=(
            pl.BlockSpec((chunk_steps, B, O), lambda c: (c, 0, 0)),  # chunked writeback
            pl.BlockSpec((B, H), lambda c: (0, 0)),                  # final hidden
        ),
        scratch_shapes=[pltpu.VMEM((B, H), jnp.float32)],            # resident hidden
        compiler_params=pltpu.CompilerParams(
            dimension_semantics=("arbitrary",)),                     # recurrence in time
    )(xs, h0, w_x, w_h, bias)
    return out, h_final


# ---------------------------------------------------------------------------
# Pure-JAX references.
# ---------------------------------------------------------------------------
def _rnn_cell_ref(x, hidden, w_ih, b_ih, w_io, b_io):
    combined = jnp.concatenate([x, hidden], axis=1)
    h_new = combined @ w_ih.T + b_ih
    logits = combined @ w_io.T + b_io
    return jax.nn.log_softmax(logits, axis=1), h_new


def _rnn_seq_ref(xs, h0, w_ih, b_ih, w_io, b_io):
    def step(h, x):
        out, h_new = _rnn_cell_ref(x, h, w_ih, b_ih, w_io, b_io)
        return h_new, out
    h_final, outs = jax.lax.scan(step, h0, xs)
    return outs, h_final


if __name__ == "__main__":
    key = jax.random.PRNGKey(0)
    B, I, H, O, T = 2, 16, 32, 8, 8
    k_x, k_h, k_wih, k_bih, k_wio, k_bio, k_xs = jax.random.split(key, 7)

    x = jax.random.normal(k_x, (B, I), dtype=jnp.float32)
    hidden = jax.random.normal(k_h, (B, H), dtype=jnp.float32)
    w_ih = 0.1 * jax.random.normal(k_wih, (H, I + H), dtype=jnp.float32)
    b_ih = 0.1 * jax.random.normal(k_bih, (H,), dtype=jnp.float32)
    w_io = 0.1 * jax.random.normal(k_wio, (O, I + H), dtype=jnp.float32)
    b_io = 0.1 * jax.random.normal(k_bio, (O,), dtype=jnp.float32)

    # ---- single-cell forward (matches RNN.forward) ----
    w_x, w_h, bias = prepare_rnn_params(w_ih, b_ih, w_io, b_io, I)  # once
    out, h_new = rnn_cell(x, hidden, w_x, w_h, bias)
    jax.block_until_ready((out, h_new))

    out_ref, h_ref = _rnn_cell_ref(x, hidden, w_ih, b_ih, w_io, b_io)
    assert out.shape == (B, O) and h_new.shape == (B, H)
    assert bool(jnp.allclose(out, out_ref, atol=1e-5, rtol=1e-5))
    assert bool(jnp.allclose(h_new, h_ref, atol=1e-5, rtol=1e-5))
    # log-softmax rows must sum to 1 in probability space
    assert bool(jnp.allclose(jnp.sum(jnp.exp(out), axis=1), 1.0, atol=1e-5))

    # ---- multi-timestep sequence (single pallas_call, hidden state in VMEM) ----
    xs = jax.random.normal(k_xs, (T, B, I), dtype=jnp.float32)
    outs, h_fin = rnn_sequence(xs, hidden, w_x, w_h, bias, chunk_steps=4)
    jax.block_until_ready((outs, h_fin))

    outs_ref, h_fin_ref = _rnn_seq_ref(xs, hidden, w_ih, b_ih, w_io, b_io)
    assert outs.shape == (T, B, O) and h_fin.shape == (B, H)
    assert bool(jnp.allclose(outs, outs_ref, atol=1e-4, rtol=1e-4))
    assert bool(jnp.allclose(h_fin, h_fin_ref, atol=1e-4, rtol=1e-4))

    print("KERNEL_OK")
</pallas_src>

<mosaic_0001>
module attributes {stable_mosaic.version = 11 : i64} {
  func.func @_rnn_cell_kernel(%arg0: i32, %arg1: memref<2x16xf32, #tpu.memory_space<vmem>>, %arg2: memref<2x32xf32, #tpu.memory_space<vmem>>, %arg3: memref<16x40xf32, #tpu.memory_space<vmem>>, %arg4: memref<32x40xf32, #tpu.memory_space<vmem>>, %arg5: memref<1x40xf32, #tpu.memory_space<vmem>>, %arg6: memref<2x8xf32, #tpu.memory_space<vmem>>, %arg7: memref<2x32xf32, #tpu.memory_space<vmem>>) attributes {dimension_semantics = [#tpu.dimension_semantics<arbitrary>], iteration_bounds = array<i64: 1>, scalar_prefetch = 0 : i64, scratch_operands = 0 : i64, tpu.core_type = #tpu.core_type<tc>, window_params = [{pipeline_mode = #tpu.pipeline_mode<synchronous>, transform_indices = @transform_0, window_bounds = array<i64: 2, 16>}, {pipeline_mode = #tpu.pipeline_mode<synchronous>, transform_indices = @transform_1, window_bounds = array<i64: 2, 32>}, {pipeline_mode = #tpu.pipeline_mode<synchronous>, transform_indices = @transform_2, window_bounds = array<i64: 16, 40>}, {pipeline_mode = #tpu.pipeline_mode<synchronous>, transform_indices = @transform_3, window_bounds = array<i64: 32, 40>}, {pipeline_mode = #tpu.pipeline_mode<synchronous>, transform_indices = @transform_4, window_bounds = array<i64: 1, 40>}, {pipeline_mode = #tpu.pipeline_mode<synchronous>, transform_indices = @transform_5, window_bounds = array<i64: 2, 8>}, {pipeline_mode = #tpu.pipeline_mode<synchronous>, transform_indices = @transform_6, window_bounds = array<i64: 2, 32>}]} {
    %c0 = arith.constant 0 : index
    %c0_0 = arith.constant 0 : index
    %0 = vector.load %arg1[%c0, %c0_0] : memref<2x16xf32, #tpu.memory_space<vmem>>, vector<2x16xf32>
    %c0_1 = arith.constant 0 : index
    %c0_2 = arith.constant 0 : index
    %1 = vector.load %arg3[%c0_1, %c0_2] : memref<16x40xf32, #tpu.memory_space<vmem>>, vector<16x40xf32>
    %cst = arith.constant dense<0.000000e+00> : vector<2x40xf32>
    %2 = tpu.matmul %0, %1, %cst {dimension_numbers = #tpu.dot_dimension_numbers<[1], [0], [0], [1], [0, 0, 1, 1], [], []>} : vector<2x16xf32>, vector<16x40xf32>, vector<2x40xf32> -> vector<2x40xf32>
    %c0_3 = arith.constant 0 : index
    %c0_4 = arith.constant 0 : index
    %3 = vector.load %arg2[%c0_3, %c0_4] : memref<2x32xf32, #tpu.memory_space<vmem>>, vector<2x32xf32>
    %c0_5 = arith.constant 0 : index
    %c0_6 = arith.constant 0 : index
    %4 = vector.load %arg4[%c0_5, %c0_6] : memref<32x40xf32, #tpu.memory_space<vmem>>, vector<32x40xf32>
    %cst_7 = arith.constant dense<0.000000e+00> : vector<2x40xf32>
    %5 = tpu.matmul %3, %4, %cst_7 {dimension_numbers = #tpu.dot_dimension_numbers<[1], [0], [0], [1], [0, 0, 1, 1], [], []>} : vector<2x32xf32>, vector<32x40xf32>, vector<2x40xf32> -> vector<2x40xf32>
    %6 = arith.addf %2, %5 : vector<2x40xf32>
    %c0_8 = arith.constant 0 : index
    %c0_9 = arith.constant 0 : index
    %7 = vector.load %arg5[%c0_8, %c0_9] : memref<1x40xf32, #tpu.memory_space<vmem>>, vector<1x40xf32>
    %8 = vector.broadcast %7 : vector<1x40xf32> to vector<2x40xf32>
    %9 = arith.addf %6, %8 : vector<2x40xf32>
    %10 = vector.extract_strided_slice %9 {offsets = [0, 0], sizes = [2, 32], strides = [1, 1]} : vector<2x40xf32> to vector<2x32xf32>
    %11 = vector.extract_strided_slice %9 {offsets = [0, 32], sizes = [2, 8], strides = [1, 1]} : vector<2x40xf32> to vector<2x8xf32>
    %cst_10 = arith.constant dense<0xFF800000> : vector<2xf32>
    %12 = vector.multi_reduction <maximumf>, %11, %cst_10 [1] : vector<2x8xf32> to vector<2xf32>
    %13 = vector.shape_cast %12 : vector<2xf32> to vector<2x1xf32>
    %14 = vector.broadcast %13 : vector<2x1xf32> to vector<2x8xf32>
    %15 = arith.subf %11, %14 : vector<2x8xf32>
    %16 = math.exp %15 : vector<2x8xf32>
    %cst_11 = arith.constant dense<0.000000e+00> : vector<2xf32>
    %17 = vector.multi_reduction <add>, %16, %cst_11 [1] : vector<2x8xf32> to vector<2xf32>
    %18 = vector.shape_cast %17 : vector<2xf32> to vector<2x1xf32>
    %19 = math.log %18 : vector<2x1xf32>
    %20 = vector.broadcast %19 : vector<2x1xf32> to vector<2x8xf32>
    %21 = arith.subf %15, %20 : vector<2x8xf32>
    %c0_12 = arith.constant 0 : index
    %c0_13 = arith.constant 0 : index
    %22 = vector.load %arg6[%c0_12, %c0_13] : memref<2x8xf32, #tpu.memory_space<vmem>>, vector<2x8xf32>
    tpu.vector_store %arg6[%c0_12, %c0_13], %21 {strides = array<i32>} : memref<2x8xf32, #tpu.memory_space<vmem>>, vector<2x8xf32>,
    %c0_14 = arith.constant 0 : index
    %c0_15 = arith.constant 0 : index
    %23 = vector.load %arg7[%c0_14, %c0_15] : memref<2x32xf32, #tpu.memory_space<vmem>>, vector<2x32xf32>
    tpu.vector_store %arg7[%c0_14, %c0_15], %10 {strides = array<i32>} : memref<2x32xf32, #tpu.memory_space<vmem>>, vector<2x32xf32>,
    return
  }
  func.func @transform_0(%arg0: i32) -> (i32, i32) {
    %c0_i32 = arith.constant 0 : i32
    %c0_i32_0 = arith.constant 0 : i32
    %c0_i32_1 = arith.constant 0 : i32
    return %c0_i32, %c0_i32_0 : i32, i32
  }
  func.func @transform_1(%arg0: i32) -> (i32, i32) {
    %c0_i32 = arith.constant 0 : i32
    %c0_i32_0 = arith.constant 0 : i32
    %c0_i32_1 = arith.constant 0 : i32
    return %c0_i32, %c0_i32_0 : i32, i32
  }
  func.func @transform_2(%arg0: i32) -> (i32, i32) {
    %c0_i32 = arith.constant 0 : i32
    %c0_i32_0 = arith.constant 0 : i32
    %c0_i32_1 = arith.constant 0 : i32
    return %c0_i32, %c0_i32_0 : i32, i32
  }
  func.func @transform_3(%arg0: i32) -> (i32, i32) {
    %c0_i32 = arith.constant 0 : i32
    %c0_i32_0 = arith.constant 0 : i32
    %c0_i32_1 = arith.constant 0 : i32
    return %c0_i32, %c0_i32_0 : i32, i32
  }
  func.func @transform_4(%arg0: i32) -> (i32, i32) {
    %c0_i32 = arith.constant 0 : i32
    %c0_i32_0 = arith.constant 0 : i32
    %c0_i32_1 = arith.constant 0 : i32
    return %c0_i32, %c0_i32_0 : i32, i32
  }
  func.func @transform_5(%arg0: i32) -> (i32, i32) {
    %c0_i32 = arith.constant 0 : i32
    %c0_i32_0 = arith.constant 0 : i32
    %c0_i32_1 = arith.constant 0 : i32
    return %c0_i32, %c0_i32_0 : i32, i32
  }
  func.func @transform_6(%arg0: i32) -> (i32, i32) {
    %c0_i32 = arith.constant 0 : i32
    %c0_i32_0 = arith.constant 0 : i32
    %c0_i32_1 = arith.constant 0 : i32
    return %c0_i32, %c0_i32_0 : i32, i32
  }
}

</mosaic_0001>

<llo_original>
// kernel: tpu_custom_call.1
$region0: #{tpu_custom_call.1}
  #allocation0 [shape = 'u32[]', space=smem, size = 0x4, offset = 0x4, fixed_abs, tag = 'smem constant byte address 0x4 - core index']
  #allocation1 [shape = 'u32[72,128]{1,0:T(1,128)}', space=vmem, size = 0x9000, scoped, tag = 'internal scratch']
  %s0 = inlined_call_operand.hbm [shape: f32[2,16], index: 0, kind: input, shape index: {}]
  %s1 = inlined_call_operand.hbm [shape: f32[2,32], index: 1, kind: input, shape index: {}]
  %s2 = inlined_call_operand.hbm [shape: f32[16,40], index: 2, kind: input, shape index: {}]
  %s3 = inlined_call_operand.hbm [shape: f32[32,40], index: 3, kind: input, shape index: {}]
  %s4 = inlined_call_operand.vmem [shape: f32[1,40], index: 4, kind: input, shape index: {}]
  %s5 = inlined_call_operand.hbm [shape: f32[2,8], index: 5, kind: output, shape index: {0}]
  %s6 = inlined_call_operand.hbm [shape: f32[2,32], index: 6, kind: output, shape index: {1}]
  %7 = xla_tuple %s5, %s6
  %s8 = sld [smem:[#allocation0]]
  $region54: #{tpu_custom_call.1} parent=0
    _
  %s10 = ssub.s32 1, %s8
  %s11 = scalar_select 0, %s10, %s8
  $region1: #{tpu_custom_call.1} parent=0
    #allocation2 [shape = 'u8[1024]{0}', space=vmem, size = 0x400, scoped, tag = 'input window, operand 0, single buffered']
    #allocation3 [shape = 's32[1]{0}', space=sflag, size = 0x4, scoped, tag = 'scoped memory for tpu_custom_call.1']
    #allocation4 [shape = 's32[1]{0}', space=sflag, size = 0x4, scoped, tag = 'scoped memory for tpu_custom_call.1']
    #allocation5 [shape = 'u8[1024]{0}', space=vmem, size = 0x400, scoped, tag = 'input window, operand 1, single buffered']
    #allocation6 [shape = 's32[1]{0}', space=sflag, size = 0x4, scoped, tag = 'scoped memory for tpu_custom_call.1']
    #allocation7 [shape = 'u8[8192]{0}', space=vmem, size = 0x2000, scoped, tag = 'input window, operand 2, single buffered']
    #allocation8 [shape = 'u8[16384]{0}', space=vmem, size = 0x4000, scoped, tag = 'input window, operand 3, single buffered']
    #allocation9 [shape = 's32[1]{0}', space=sflag, size = 0x4, scoped, tag = 'scoped memory for tpu_custom_call.1']
    #allocation10 [shape = 'u8[1024]{0}', space=vmem, size = 0x400, scoped, tag = 'output window, operand 0, single buffered']
    #allocation11 [shape = 'u8[1024]{0}', space=vmem, size = 0x400, scoped, tag = 'output window, operand 1, single buffered']
    #allocation12 [shape = 's32[1]{0}', space=sflag, size = 0x4, scoped, tag = 'scoped memory for tpu_custom_call.1']
    %12 = vsyncpa [#allocation3], 0
    %13 = vsyncpa [#allocation6], 0
    %14 = vsyncpa [#allocation9], 0
    %15 = vsyncpa [#allocation4], 0
    %16 = vsyncpa [#allocation12], 0
    // Predicated region
    $region2: #{tpu_custom_call.1} parent=1 // pred_check
      _
    $region3: #{tpu_custom_call.1} parent=1 // pred_check_branch
      %18 = sbr.rel (0) target = $region5
    $region4: #{tpu_custom_call.1} parent=1 // pred_region
      %20 = vsyncadd [#allocation3], 0
      %s22 = sshll.u32 %s0, 4
      %s23 = int_to_ptr.hbm [resolvable:$true] %s22
      %s24 = sshll.u32 [#allocation2], 4
      %s25 = int_to_ptr.vmem [resolvable:$true] %s24
      %27 = dma.hbm_to_vmem [thread:$0]  %s23, 32, %s25, [#allocation3]
    $region5: #{tpu_custom_call.1} parent=1 // pred_fallthru
      _
    // Predicated region
    $region6: #{tpu_custom_call.1} parent=1 // pred_check
      _
    $region7: #{tpu_custom_call.1} parent=1 // pred_check_branch
      %29 = sbr.rel (0) target = $region9
    $region8: #{tpu_custom_call.1} parent=1 // pred_region
      %31 = vsyncadd [#allocation6], 0
      %s33 = sshll.u32 %s1, 4
      %s34 = int_to_ptr.hbm [resolvable:$true] %s33
      %s35 = sshll.u32 [#allocation5], 4
      %s36 = int_to_ptr.vmem [resolvable:$true] %s35
      %38 = dma.hbm_to_vmem [thread:$0]  %s34, 32, %s36, [#allocation6]
    $region9: #{tpu_custom_call.1} parent=1 // pred_fallthru
      _
    // Predicated region
    $region10: #{tpu_custom_call.1} parent=1 // pred_check
      _
    $region11: #{tpu_custom_call.1} parent=1 // pred_check_branch
      %40 = sbr.rel (0) target = $region13
    $region12: #{tpu_custom_call.1} parent=1 // pred_region
      %42 = vsyncadd [#allocation6], 0
      %s43 = sshll.u32 %s2, 4
      %s44 = int_to_ptr.hbm [resolvable:$true] %s43
      %s45 = sshll.u32 [#allocation7], 4
      %s46 = int_to_ptr.vmem [resolvable:$true] %s45
      %51 = dma.hbm_to_vmem [thread:$0]  %s44, 256, %s46, [#allocation6], 128, 128, 8
    $region13: #{tpu_custom_call.1} parent=1 // pred_fallthru
      _
    // Predicated region
    $region14: #{tpu_custom_call.1} parent=1 // pred_check
      _
    $region15: #{tpu_custom_call.1} parent=1 // pred_check_branch
      %53 = sbr.rel (0) target = $region17
    $region16: #{tpu_custom_call.1} parent=1 // pred_region
      %55 = vsyncadd [#allocation9], 0
      %s56 = sshll.u32 %s3, 4
      %s57 = int_to_ptr.hbm [resolvable:$true] %s56
      %s58 = sshll.u32 [#allocation8], 4
      %s59 = int_to_ptr.vmem [resolvable:$true] %s58
      %64 = dma.hbm_to_vmem [thread:$0]  %s57, 512, %s59, [#allocation9], 128, 128, 8
    $region17: #{tpu_custom_call.1} parent=1 // pred_fallthru
      _
    // Predicated region
    $region18: #{tpu_custom_call.1} parent=1 // pred_check
      _
    $region19: #{tpu_custom_call.1} parent=1 // pred_check_branch
      %66 = sbr.rel (0) target = $region21
    $region20: #{tpu_custom_call.1} parent=1 // pred_region
      _
    $region21: #{tpu_custom_call.1} parent=1 // pred_fallthru
      _
    // Predicated region
    $region22: #{tpu_custom_call.1} parent=1 // pred_check
      _
    $region23: #{tpu_custom_call.1} parent=1 // pred_check_branch
      %68 = sbr.rel (0) target = $region25
    $region24: #{tpu_custom_call.1} parent=1 // pred_region
      %70 = dma.done [#allocation3], 32
    $region25: #{tpu_custom_call.1} parent=1 // pred_fallthru
      _
    // Predicated region
    $region26: #{tpu_custom_call.1} parent=1 // pred_check
      _
    $region27: #{tpu_custom_call.1} parent=1 // pred_check_branch
      %72 = sbr.rel (0) target = $region29
    $region28: #{tpu_custom_call.1} parent=1 // pred_region
      %74 = dma.done [#allocation6], 32
    $region29: #{tpu_custom_call.1} parent=1 // pred_fallthru
      _
    // Predicated region
    $region30: #{tpu_custom_call.1} parent=1 // pred_check
      _
    $region31: #{tpu_custom_call.1} parent=1 // pred_check_branch
      %76 = sbr.rel (0) target = $region33
    $region32: #{tpu_custom_call.1} parent=1 // pred_region
      %78 = dma.done [#allocation6], 256
    $region33: #{tpu_custom_call.1} parent=1 // pred_fallthru
      _
    // Predicated region
    $region34: #{tpu_custom_call.1} parent=1 // pred_check
      _
    $region35: #{tpu_custom_call.1} parent=1 // pred_check_branch
      %80 = sbr.rel (0) target = $region37
    $region36: #{tpu_custom_call.1} parent=1 // pred_region
      %82 = dma.done [#allocation9], 512
    $region37: #{tpu_custom_call.1} parent=1 // pred_fallthru
      _
    %v83 = vld [vmem:[#allocation2] sm:$0x3]
    %v84 = vld [vmem:[#allocation7] sm:$0xff]
    %v85 = vld [vmem:[#allocation7 + $0x8] sm:$0xff]
    %v86 = vld [vmem:[#allocation5] sm:$0x3]
    %v87 = vld [vmem:[#allocation8] sm:$0xff]
    %v88 = vld [vmem:[#allocation8 + $0x8] sm:$0xff]
    %v89 = vld [vmem:[#allocation8 + $0x10] sm:$0xff]
    %v90 = vld [vmem:[#allocation8 + $0x18] sm:$0xff]
    %vm91 = vcmask 261120
    %v93 = vsel %vm91, %v86, 0
    %95 = vmatpush.msra.mxu0 0.0
    %96 = vmatpush.msra.mxu0 0.0
    %97 = vmatpush.msra.mxu0 0.0
    %98 = vmatpush.msra.mxu0 0.0
    %99 = vmatpush.msra.mxu0 0.0
    %100 = vmatpush.msra.mxu0 0.0
    %101 = vmatpush.msra.mxu0 0.0
    %102 = vmatpush.msra.mxu0 0.0
    %103 = vmatpush.msra.mxu0 0.0
    %104 = vmatpush.msra.mxu0 0.0
    %105 = vmatpush.msra.mxu0 0.0
    %106 = vmatpush.msra.mxu0 0.0
    %107 = vmatpush.msra.mxu0 %v90
    %108 = vmatpush.msra.mxu0 %v89
    %109 = vmatpush.msra.mxu0 %v88
    %110 = vmatpush.msra.mxu0 %v87
    %111 = vmatmul.f32.gmra.mxu0 %v93
    %v112 = vpop.f32.mrf.mxu0
    %v113 = vadd.f32 0.0, %v112
    %114 = vdwg.mxu0
    %vm115 = vcmask 130048
    %v117 = vsel %vm115, %v83, 0
    %119 = vmatpush.msra.mxu0 0.0
    %120 = vmatpush.msra.mxu0 0.0
    %121 = vmatpush.msra.mxu0 0.0
    %122 = vmatpush.msra.mxu0 0.0
    %123 = vmatpush.msra.mxu0 0.0
    %124 = vmatpush.msra.mxu0 0.0
    %125 = vmatpush.msra.mxu0 0.0
    %126 = vmatpush.msra.mxu0 0.0
    %127 = vmatpush.msra.mxu0 0.0
    %128 = vmatpush.msra.mxu0 0.0
    %129 = vmatpush.msra.mxu0 0.0
    %130 = vmatpush.msra.mxu0 0.0
    %131 = vmatpush.msra.mxu0 0.0
    %132 = vmatpush.msra.mxu0 0.0
    %133 = vmatpush.msra.mxu0 %v85
    %134 = vmatpush.msra.mxu0 %v84
    %135 = vmatmul.f32.gmra.mxu0 %v117
    %v136 = vpop.f32.mrf.mxu0
    %v137 = vadd.f32 %v113, %v136
    %138 = vdwg.mxu0
    %v139 = vld [vmem:[%s4] sm:$0x1]
    %v141 = vperm.slane %v139, 0
    %v143 = vadd.f32 %v137, %v141
    %vm144 = vcmask 320768
    %v145 = vsel %vm144, %v143, -inf
    %146 = vmax.xlane.f32.xlu0 %v145
    %v147 = vpop.xlane.xlu0 %146
    %v148 = vsub.f32 %v143, %v147
    %v149 = vmul.f32 %v148, 1.442695
    %v150 = vpow.pop %v149
    %152 = vrot.lane.b32.xlu0 %v150, 96
    %v153 = vpop.permute.xlu0 %152
    %vm155 = vcmask 58368
    %v156 = vsel %vm155, %v153, 0.0
    %157 = vadd.xlane.f32.xlu0 %v156
    %v158 = vpop.xlane.xlu0 %157
    %v159 = vlog2.pop %v158
    %v160 = vmul.f32 %v159, 0.6931472
    %v161 = vsub.f32 %v148, %v160
    %163 = vrot.lane.b32.xlu0 %v161, 96
    %v164 = vpop.permute.xlu0 %163
    %166 = vst.msk [vmem:[#allocation10] sm:$0x3] %vm155, %v164
    %vm167 = vcmask 254976
    %168 = vst.msk [vmem:[#allocation11] sm:$0x3] %vm167, %v143
    // Predicated region
    $region38: #{tpu_custom_call.1} parent=1 // pred_check
      _
    $region39: #{tpu_custom_call.1} parent=1 // pred_check_branch
      %170 = sbr.rel (0) target = $region41
    $region40: #{tpu_custom_call.1} parent=1 // pred_region
      %172 = vsyncadd [#allocation4], 0
      %s174 = sshll.u32 [#allocation10], 4
      %s175 = int_to_ptr.vmem [resolvable:$true] %s174
      %s176 = sshll.u32 %s5, 4
      %s177 = int_to_ptr.hbm [resolvable:$true] %s176
      %179 = dma.vmem_to_hbm [thread:$0]  %s175, 32, %s177, [#allocation4]
    $region41: #{tpu_custom_call.1} parent=1 // pred_fallthru
      _
    // Predicated region
    $region42: #{tpu_custom_call.1} parent=1 // pred_check
      _
    $region43: #{tpu_custom_call.1} parent=1 // pred_check_branch
      %181 = sbr.rel (0) target = $region45
    $region44: #{tpu_custom_call.1} parent=1 // pred_region
      %183 = vsyncadd [#allocation12], 0
      %s185 = sshll.u32 [#allocation11], 4
      %s186 = int_to_ptr.vmem [resolvable:$true] %s185
      %s187 = sshll.u32 %s6, 4
      %s188 = int_to_ptr.hbm [resolvable:$true] %s187
      %190 = dma.vmem_to_hbm [thread:$0]  %s186, 32, %s188, [#allocation12]
    $region45: #{tpu_custom_call.1} parent=1 // pred_fallthru
      _
    // Predicated region
    $region46: #{tpu_custom_call.1} parent=1 // pred_check
      _
    $region47: #{tpu_custom_call.1} parent=1 // pred_check_branch
      %192 = sbr.rel (0) target = $region49
    $region48: #{tpu_custom_call.1} parent=1 // pred_region
      %194 = dma.done [#allocation4], 32
    $region49: #{tpu_custom_call.1} parent=1 // pred_fallthru
      _
    // Predicated region
    $region50: #{tpu_custom_call.1} parent=1 // pred_check
      _
    $region51: #{tpu_custom_call.1} parent=1 // pred_check_branch
      %196 = sbr.rel (0) target = $region53
    $region52: #{tpu_custom_call.1} parent=1 // pred_region
      %198 = dma.done [#allocation12], 32
    $region53: #{tpu_custom_call.1} parent=1 // pred_fallthru
      _
    %199 = vsyncpa [#allocation3], 1
    %200 = vsyncpa [#allocation6], 1
    %201 = vsyncpa [#allocation9], 1
    %202 = vsyncpa [#allocation4], 1
    %203 = vsyncpa [#allocation12], 1

</llo_original>
